<compile_context>
chip_gen: v5e
topology: v5e:2x2
jax: 0.10.0
libtpu: 0.0.40
codegen_flags: <defaults>
</compile_context>

<pallas_src>
from functools import partial

import jax
import jax.numpy as jnp
from jax.experimental import pallas as pl
from jax.experimental.pallas import tpu as pltpu


# ----------------------------- Pallas kernel --------------------------------

def _gemm_shift_act_kernel(w_ref, x_ref, b_ref, o_ref, acc_ref, *, apply_relu):
    """acc += w @ x over the K grid axis; on last K step: out = act(acc + shift)."""
    k = pl.program_id(2)

    @pl.when(k == 0)
    def _():
        acc_ref[...] = jnp.zeros_like(acc_ref)

    acc_ref[...] += jnp.dot(w_ref[...], x_ref[...],
                            preferred_element_type=jnp.float32)

    @pl.when(k == pl.num_programs(2) - 1)
    def _():
        out = acc_ref[...] + b_ref[...]            # (tn, tm) + (tn, 1)
        if apply_relu:
            out = jnp.maximum(out, 0.0)
        o_ref[...] = out.astype(o_ref.dtype)


def _round_up(x, m):
    return (x + m - 1) // m * m


def gemm_shift_act(w, x, shift, relu, out_dtype,
                   tm_target=2048, tk_target=512, tn_target=256):
    """out(N, M) = act(w(N, K) @ x(K, M) + shift(N, 1)), fused on the MXU.

    Lane-dense orientation: M (flattened spatial, large) is the lane dim of the
    streamed activation and of the output, so stores are full-lane even when the
    channel count N is tiny.  w / x are expected in bfloat16, shift in float32.
    """
    N, K = w.shape
    K2, M = x.shape
    assert K == K2
    assert shift.shape == (N, 1)

    # Channel / tap dims are tiny in this model -> full-extent blocks (no padding).
    tn = N if N <= tn_target else tn_target
    tk = K if K <= tk_target else tk_target
    if M <= 128:
        tm = M                                     # full extent, no padding
    else:
        # >= 2 M-blocks so both v7x TensorCores get work; cap at tm_target.
        tm = min(tm_target, _round_up((M + 1) // 2, 128))

    Np, Kp, Mp = _round_up(N, tn), _round_up(K, tk), _round_up(M, tm)

    wp = w if (Np == N and Kp == K) else jnp.pad(w, ((0, Np - N), (0, Kp - K)))
    xp = x if (Kp == K and Mp == M) else jnp.pad(x, ((0, Kp - K), (0, Mp - M)))
    bp = shift if Np == N else jnp.pad(shift, ((0, Np - N), (0, 0)))

    grid = (Np // tn, Mp // tm, Kp // tk)

    out = pl.pallas_call(
        partial(_gemm_shift_act_kernel, apply_relu=relu),
        out_shape=jax.ShapeDtypeStruct((Np, Mp), out_dtype),
        grid_spec=pltpu.PrefetchScalarGridSpec(
            num_scalar_prefetch=0,
            grid=grid,
            in_specs=[
                pl.BlockSpec((tn, tk), lambda i, j, k: (i, k)),
                pl.BlockSpec((tk, tm), lambda i, j, k: (k, j)),
                pl.BlockSpec((tn, 1), lambda i, j, k: (i, 0)),
            ],
            out_specs=pl.BlockSpec((tn, tm), lambda i, j, k: (i, j)),
            scratch_shapes=[pltpu.VMEM((tn, tm), jnp.float32)],
        ),
        compiler_params=pltpu.CompilerParams(
            dimension_semantics=("parallel", "parallel", "arbitrary"),
            vmem_limit_bytes=32 * 1024 * 1024),
    )(wp, xp, bp)

    if Np != N or Mp != M:
        out = out[:N, :M]
    return out


# --------------------------- conv glue (plain JAX) ---------------------------
# Internal activation layout is channels-first: (C, N, H, W), bfloat16.

def conv2d_s2_3x3(x_cnhw, wt, shift, relu):
    """Conv2d(k=3, s=2, p=1): 9-tap extraction + fused Pallas GEMM."""
    Cin, N, H, W = x_cnhw.shape
    Cout = wt.shape[0]
    Ho, Wo = H // 2, W // 2
    xp = jnp.pad(x_cnhw, ((0, 0), (0, 0), (1, 1), (1, 1)))
    taps = [xp[:, :, di:di + 2 * Ho:2, dj:dj + 2 * Wo:2]
            for di in range(3) for dj in range(3)]
    patches = jnp.concatenate(taps, axis=0).reshape(9 * Cin, N * Ho * Wo)
    out = gemm_shift_act(wt, patches, shift, relu, out_dtype=jnp.bfloat16)
    return out.reshape(Cout, N, Ho, Wo)


# Sub-pixel decomposition of ConvTranspose2d(k=3, s=2, p=1, op=1):
#   y[co, 2m+py, 2n+px] = sum_{dy,dx,ci} x[ci, m+dy, n+dx] * W[ci, co, ky(py,dy), kx(px,dx)]
# derived from oy = 2*iy - 1 + ky; (py=0, dy=1) and (px=0, dx=1) taps are structurally 0.
_TAPS = ((0, 0), (0, 1), (1, 0), (1, 1))
_KIDX = {(0, 0): 1, (1, 0): 2, (1, 1): 0}   # (phase, delta) -> kernel index


def conv_transpose2d_s2_3x3(x_cnhw, wt_big, shift_big, relu, out_dtype):
    """ConvTranspose2d(k=3, s=2, p=1, op=1) as one sub-pixel GEMM (no zero-insertion)."""
    Cin, N, H, W = x_cnhw.shape
    Cout = wt_big.shape[0] // 4
    xp = jnp.pad(x_cnhw, ((0, 0), (0, 0), (0, 1), (0, 1)))       # bottom/right halo
    patches = jnp.concatenate(
        [xp[:, :, dy:dy + H, dx:dx + W] for dy, dx in _TAPS], axis=0)
    patches = patches.reshape(4 * Cin, N * H * W)
    out = gemm_shift_act(wt_big, patches, shift_big, relu, out_dtype)  # (4*Cout, M)
    # De-interleave the 2x2 output phases.
    out = out.reshape(2, 2, Cout, N, H, W)            # (py, px, co, n, h, w)
    out = out.transpose(2, 3, 4, 0, 5, 1).reshape(Cout, N, 2 * H, 2 * W)
    return out


# ------------------------------ model params --------------------------------

def init_autoencoder_params(key, in_channels, filters, ds):
    """Raw PyTorch-layout parameters (orthogonal weights, zero biases)."""
    orth = jax.nn.initializers.orthogonal(scale=1.0)
    chans = [in_channels] + [filters * (2 ** i) for i in range(ds)]
    enc, dec = [], []
    for i in range(ds):
        key, k1 = jax.random.split(key)
        cin, cout = chans[i], chans[i + 1]
        w = orth(k1, (cout, cin * 9), jnp.float32).reshape(cout, cin, 3, 3)
        enc.append((w, jnp.zeros((cout,), jnp.float32)))
    for i in range(ds):
        key, k1 = jax.random.split(key)
        cin, cout = chans[ds - i], chans[ds - i - 1]
        # PyTorch ConvTranspose2d weight layout: (Cin, Cout, kh, kw)
        w = orth(k1, (cin, cout * 9), jnp.float32).reshape(cin, cout, 3, 3)
        dec.append((w, jnp.zeros((cout,), jnp.float32)))
    return enc, dec


def _bn_scale_shift(bias, use_bn, eps=1e-5):
    if use_bn:
        # eval-mode BN with gamma=1, beta=0, running_mean=0, running_var=1
        s = 1.0 / jnp.sqrt(1.0 + eps)
        scale = jnp.full(bias.shape, s, jnp.float32)
        shift = bias * s
    else:
        scale = jnp.ones(bias.shape, jnp.float32)
        shift = bias.astype(jnp.float32)
    return scale, shift


def _subpixel_weight_T(w_iohw):
    """(Cin, Cout, 3, 3) -> (4*Cout, 4*Cin) GEMM weight (rows = phases, cols = taps)."""
    Cin, Cout = w_iohw.shape[0], w_iohw.shape[1]
    rows = []
    for py, px in _TAPS:                       # output-phase blocks -> rows
        blocks = []
        for dy, dx in _TAPS:                   # input-tap blocks   -> cols
            if (py == 0 and dy == 1) or (px == 0 and dx == 1):
                blocks.append(jnp.zeros((Cout, Cin), w_iohw.dtype))
            else:
                blocks.append(w_iohw[:, :, _KIDX[(py, dy)], _KIDX[(px, dx)]].T)
        rows.append(jnp.concatenate(blocks, axis=1))
    return jnp.concatenate(rows, axis=0)


def prepare_params(enc_params, dec_params, bn):
    """One-time prep: fold BN scale into weights, build bf16 GEMM-layout weights."""
    enc_prepped = []
    for (w, b) in enc_params:                              # w: (Cout, Cin, 3, 3)
        scale, shift = _bn_scale_shift(b, bn)
        wt = jnp.transpose(w, (0, 2, 3, 1)).reshape(w.shape[0], -1)   # (Cout, 9*Cin)
        wt = (wt * scale[:, None]).astype(jnp.bfloat16)
        enc_prepped.append((wt, shift[:, None]))
    dec_prepped = []
    n_dec = len(dec_params)
    for i, (w, b) in enumerate(dec_params):                # w: (Cin, Cout, 3, 3)
        last = (i == n_dec - 1)
        scale, shift = _bn_scale_shift(b, bn and not last)
        wt_big = _subpixel_weight_T(w * scale[None, :, None, None])   # (4*Cout, 4*Cin)
        wt_big = wt_big.astype(jnp.bfloat16)
        shift_big = jnp.tile(shift, 4)[:, None]                       # (4*Cout, 1)
        dec_prepped.append((wt_big, shift_big))
    return tuple(enc_prepped), tuple(dec_prepped)


# ------------------------------- forward pass --------------------------------

@jax.jit
def autoencoder_forward(x_nchw, enc_prepped, dec_prepped):
    # Channels-first internal layout (C, N, H, W) keeps the big flattened spatial
    # axis as the lane dim of every GEMM (lane-dense stores for tiny channel counts).
    h = jnp.transpose(x_nchw, (1, 0, 2, 3)).astype(jnp.bfloat16)
    for (wt, shift) in enc_prepped:
        h = conv2d_s2_3x3(h, wt, shift, relu=True)
    z = h
    n_dec = len(dec_prepped)
    for i, (wt, shift) in enumerate(dec_prepped):
        last = (i == n_dec - 1)
        h = conv_transpose2d_s2_3x3(
            h, wt, shift, relu=not last,
            out_dtype=jnp.float32 if last else jnp.bfloat16)
    y = jnp.transpose(h, (1, 0, 2, 3))                     # (C,N,H,W) -> NCHW
    z = jnp.transpose(z, (1, 0, 2, 3)).astype(jnp.float32)
    return y, z


# ---------------------------------- main -------------------------------------

if __name__ == "__main__":
    key = jax.random.PRNGKey(0)
    kx, kp = jax.random.split(key)

    in_channels, filters, ds, bn = 4, 8, 2, False
    batch, spatial = 2, 16

    x = jax.random.normal(kx, (batch, in_channels, spatial, spatial), jnp.float32)
    enc_params, dec_params = init_autoencoder_params(kp, in_channels, filters, ds)
    enc_prepped, dec_prepped = prepare_params(enc_params, dec_params, bn)

    y, z = autoencoder_forward(x, enc_prepped, dec_prepped)
    jax.block_until_ready((y, z))

    assert y.shape == (batch, in_channels, spatial, spatial), y.shape
    assert z.shape == (batch, filters * 2 ** (ds - 1),
                       spatial // 2 ** ds, spatial // 2 ** ds), z.shape
    assert jnp.all(jnp.isfinite(y)) and jnp.all(jnp.isfinite(z))

    print("KERNEL_OK")
</pallas_src>

<mosaic_0001>
module attributes {stable_mosaic.version = 11 : i64} {
  func.func @_gemm_shift_act_kernel(%arg0: i32, %arg1: i32, %arg2: i32, %arg3: memref<8x36xbf16, #tpu.memory_space<vmem>>, %arg4: memref<36x128xbf16, #tpu.memory_space<vmem>>, %arg5: memref<8x1xf32, #tpu.memory_space<vmem>>, %arg6: memref<8x128xbf16, #tpu.memory_space<vmem>>, %arg7: memref<8x128xf32, #tpu.memory_space<vmem>>) attributes {dimension_semantics = [#tpu.dimension_semantics<parallel>, #tpu.dimension_semantics<parallel>, #tpu.dimension_semantics<arbitrary>], iteration_bounds = array<i64: 1, 1, 1>, scalar_prefetch = 0 : i64, scratch_operands = 1 : i64, tpu.core_type = #tpu.core_type<tc>, window_params = [{transform_indices = @transform_0, window_bounds = array<i64: 8, 36>}, {transform_indices = @transform_1, window_bounds = array<i64: 36, 128>}, {transform_indices = @transform_2, window_bounds = array<i64: 8, 1>}, {transform_indices = @transform_3, window_bounds = array<i64: 8, 128>}]} {
    %c0_i32 = arith.constant 0 : i32
    %0 = arith.cmpi eq, %arg2, %c0_i32 : i32
    %1 = arith.extui %0 : i1 to i32
    %c0_i32_0 = arith.constant 0 : i32
    %2 = arith.cmpi ne, %1, %c0_i32_0 : i32
    scf.if %2 {
      %cst_10 = arith.constant 0.000000e+00 : f32
      %12 = vector.broadcast %cst_10 : f32 to vector<8x128xf32>
      %c0_11 = arith.constant 0 : index
      %c0_12 = arith.constant 0 : index
      %13 = vector.load %arg7[%c0_11, %c0_12] : memref<8x128xf32, #tpu.memory_space<vmem>>, vector<8x128xf32>
      tpu.vector_store %arg7[%c0_11, %c0_12], %12 {strides = array<i32>} : memref<8x128xf32, #tpu.memory_space<vmem>>, vector<8x128xf32>,
    } else {
    }
    %c0 = arith.constant 0 : index
    %c0_1 = arith.constant 0 : index
    %3 = vector.load %arg7[%c0, %c0_1] : memref<8x128xf32, #tpu.memory_space<vmem>>, vector<8x128xf32>
    %c0_2 = arith.constant 0 : index
    %c0_3 = arith.constant 0 : index
    %4 = vector.load %arg3[%c0_2, %c0_3] : memref<8x36xbf16, #tpu.memory_space<vmem>>, vector<8x36xbf16>
    %c0_4 = arith.constant 0 : index
    %c0_5 = arith.constant 0 : index
    %5 = vector.load %arg4[%c0_4, %c0_5] : memref<36x128xbf16, #tpu.memory_space<vmem>>, vector<36x128xbf16>
    %cst = arith.constant dense<0.000000e+00> : vector<8x128xf32>
    %6 = tpu.matmul %4, %5, %cst {dimension_numbers = #tpu.dot_dimension_numbers<[1], [0], [0], [1], [0, 0, 1, 1], [], []>} : vector<8x36xbf16>, vector<36x128xbf16>, vector<8x128xf32> -> vector<8x128xf32>
    %7 = arith.addf %3, %6 : vector<8x128xf32>
    %c0_6 = arith.constant 0 : index
    %c0_7 = arith.constant 0 : index
    %8 = vector.load %arg7[%c0_6, %c0_7] : memref<8x128xf32, #tpu.memory_space<vmem>>, vector<8x128xf32>
    tpu.vector_store %arg7[%c0_6, %c0_7], %7 {strides = array<i32>} : memref<8x128xf32, #tpu.memory_space<vmem>>, vector<8x128xf32>,
    %c0_i32_8 = arith.constant 0 : i32
    %9 = arith.cmpi eq, %arg2, %c0_i32_8 : i32
    %10 = arith.extui %9 : i1 to i32
    %c0_i32_9 = arith.constant 0 : i32
    %11 = arith.cmpi ne, %10, %c0_i32_9 : i32
    scf.if %11 {
      %c0_10 = arith.constant 0 : index
      %c0_11 = arith.constant 0 : index
      %12 = vector.load %arg7[%c0_10, %c0_11] : memref<8x128xf32, #tpu.memory_space<vmem>>, vector<8x128xf32>
      %c0_12 = arith.constant 0 : index
      %c0_13 = arith.constant 0 : index
      %13 = vector.load %arg5[%c0_12, %c0_13] : memref<8x1xf32, #tpu.memory_space<vmem>>, vector<8x1xf32>
      %14 = vector.broadcast %13 : vector<8x1xf32> to vector<8x128xf32>
      %15 = arith.addf %12, %14 : vector<8x128xf32>
      %cst_14 = arith.constant 0.000000e+00 : f32
      %16 = vector.broadcast %cst_14 : f32 to vector<8x128xf32>
      %17 = arith.maximumf %15, %16 : vector<8x128xf32>
      %18 = arith.truncf %17 : vector<8x128xf32> to vector<8x128xbf16>
      %c0_15 = arith.constant 0 : index
      %c0_16 = arith.constant 0 : index
      %19 = vector.load %arg6[%c0_15, %c0_16] : memref<8x128xbf16, #tpu.memory_space<vmem>>, vector<8x128xbf16>
      tpu.vector_store %arg6[%c0_15, %c0_16], %18 {strides = array<i32>} : memref<8x128xbf16, #tpu.memory_space<vmem>>, vector<8x128xbf16>,
    } else {
    }
    return
  }
  func.func @transform_0(%arg0: i32, %arg1: i32, %arg2: i32) -> (i32, i32) {
    %c0_i32 = arith.constant 0 : i32
    return %arg0, %arg2 : i32, i32
  }
  func.func @transform_1(%arg0: i32, %arg1: i32, %arg2: i32) -> (i32, i32) {
    %c0_i32 = arith.constant 0 : i32
    return %arg2, %arg1 : i32, i32
  }
  func.func @transform_2(%arg0: i32, %arg1: i32, %arg2: i32) -> (i32, i32) {
    %c0_i32 = arith.constant 0 : i32
    %c0_i32_0 = arith.constant 0 : i32
    return %arg0, %c0_i32 : i32, i32
  }
  func.func @transform_3(%arg0: i32, %arg1: i32, %arg2: i32) -> (i32, i32) {
    %c0_i32 = arith.constant 0 : i32
    return %arg0, %arg1 : i32, i32
  }
}

module attributes {stable_mosaic.version = 11 : i64} {
  func.func @_gemm_shift_act_kernel(%arg0: i32, %arg1: i32, %arg2: i32, %arg3: memref<16x72xbf16, #tpu.memory_space<vmem>>, %arg4: memref<72x32xbf16, #tpu.memory_space<vmem>>, %arg5: memref<16x1xf32, #tpu.memory_space<vmem>>, %arg6: memref<16x32xbf16, #tpu.memory_space<vmem>>, %arg7: memref<16x32xf32, #tpu.memory_space<vmem>>) attributes {dimension_semantics = [#tpu.dimension_semantics<parallel>, #tpu.dimension_semantics<parallel>, #tpu.dimension_semantics<arbitrary>], iteration_bounds = array<i64: 1, 1, 1>, scalar_prefetch = 0 : i64, scratch_operands = 1 : i64, tpu.core_type = #tpu.core_type<tc>, window_params = [{transform_indices = @transform_0, window_bounds = array<i64: 16, 72>}, {transform_indices = @transform_1, window_bounds = array<i64: 72, 32>}, {transform_indices = @transform_2, window_bounds = array<i64: 16, 1>}, {transform_indices = @transform_3, window_bounds = array<i64: 16, 32>}]} {
    %c0_i32 = arith.constant 0 : i32
    %0 = arith.cmpi eq, %arg2, %c0_i32 : i32
    %1 = arith.extui %0 : i1 to i32
    %c0_i32_0 = arith.constant 0 : i32
    %2 = arith.cmpi ne, %1, %c0_i32_0 : i32
    scf.if %2 {
      %cst_10 = arith.constant 0.000000e+00 : f32
      %12 = vector.broadcast %cst_10 : f32 to vector<16x32xf32>
      %c0_11 = arith.constant 0 : index
      %c0_12 = arith.constant 0 : index
      %13 = vector.load %arg7[%c0_11, %c0_12] : memref<16x32xf32, #tpu.memory_space<vmem>>, vector<16x32xf32>
      tpu.vector_store %arg7[%c0_11, %c0_12], %12 {strides = array<i32>} : memref<16x32xf32, #tpu.memory_space<vmem>>, vector<16x32xf32>,
    } else {
    }
    %c0 = arith.constant 0 : index
    %c0_1 = arith.constant 0 : index
    %3 = vector.load %arg7[%c0, %c0_1] : memref<16x32xf32, #tpu.memory_space<vmem>>, vector<16x32xf32>
    %c0_2 = arith.constant 0 : index
    %c0_3 = arith.constant 0 : index
    %4 = vector.load %arg3[%c0_2, %c0_3] : memref<16x72xbf16, #tpu.memory_space<vmem>>, vector<16x72xbf16>
    %c0_4 = arith.constant 0 : index
    %c0_5 = arith.constant 0 : index
    %5 = vector.load %arg4[%c0_4, %c0_5] : memref<72x32xbf16, #tpu.memory_space<vmem>>, vector<72x32xbf16>
    %cst = arith.constant dense<0.000000e+00> : vector<16x32xf32>
    %6 = tpu.matmul %4, %5, %cst {dimension_numbers = #tpu.dot_dimension_numbers<[1], [0], [0], [1], [0, 0, 1, 1], [], []>} : vector<16x72xbf16>, vector<72x32xbf16>, vector<16x32xf32> -> vector<16x32xf32>
    %7 = arith.addf %3, %6 : vector<16x32xf32>
    %c0_6 = arith.constant 0 : index
    %c0_7 = arith.constant 0 : index
    %8 = vector.load %arg7[%c0_6, %c0_7] : memref<16x32xf32, #tpu.memory_space<vmem>>, vector<16x32xf32>
    tpu.vector_store %arg7[%c0_6, %c0_7], %7 {strides = array<i32>} : memref<16x32xf32, #tpu.memory_space<vmem>>, vector<16x32xf32>,
    %c0_i32_8 = arith.constant 0 : i32
    %9 = arith.cmpi eq, %arg2, %c0_i32_8 : i32
    %10 = arith.extui %9 : i1 to i32
    %c0_i32_9 = arith.constant 0 : i32
    %11 = arith.cmpi ne, %10, %c0_i32_9 : i32
    scf.if %11 {
      %c0_10 = arith.constant 0 : index
      %c0_11 = arith.constant 0 : index
      %12 = vector.load %arg7[%c0_10, %c0_11] : memref<16x32xf32, #tpu.memory_space<vmem>>, vector<16x32xf32>
      %c0_12 = arith.constant 0 : index
      %c0_13 = arith.constant 0 : index
      %13 = vector.load %arg5[%c0_12, %c0_13] : memref<16x1xf32, #tpu.memory_space<vmem>>, vector<16x1xf32>
      %14 = vector.broadcast %13 : vector<16x1xf32> to vector<16x32xf32>
      %15 = arith.addf %12, %14 : vector<16x32xf32>
      %cst_14 = arith.constant 0.000000e+00 : f32
      %16 = vector.broadcast %cst_14 : f32 to vector<16x32xf32>
      %17 = arith.maximumf %15, %16 : vector<16x32xf32>
      %18 = arith.truncf %17 : vector<16x32xf32> to vector<16x32xbf16>
      %c0_15 = arith.constant 0 : index
      %c0_16 = arith.constant 0 : index
      %19 = vector.load %arg6[%c0_15, %c0_16] : memref<16x32xbf16, #tpu.memory_space<vmem>>, vector<16x32xbf16>
      tpu.vector_store %arg6[%c0_15, %c0_16], %18 {strides = array<i32>} : memref<16x32xbf16, #tpu.memory_space<vmem>>, vector<16x32xbf16>,
    } else {
    }
    return
  }
  func.func @transform_0(%arg0: i32, %arg1: i32, %arg2: i32) -> (i32, i32) {
    %c0_i32 = arith.constant 0 : i32
    return %arg0, %arg2 : i32, i32
  }
  func.func @transform_1(%arg0: i32, %arg1: i32, %arg2: i32) -> (i32, i32) {
    %c0_i32 = arith.constant 0 : i32
    return %arg2, %arg1 : i32, i32
  }
  func.func @transform_2(%arg0: i32, %arg1: i32, %arg2: i32) -> (i32, i32) {
    %c0_i32 = arith.constant 0 : i32
    %c0_i32_0 = arith.constant 0 : i32
    return %arg0, %c0_i32 : i32, i32
  }
  func.func @transform_3(%arg0: i32, %arg1: i32, %arg2: i32) -> (i32, i32) {
    %c0_i32 = arith.constant 0 : i32
    return %arg0, %arg1 : i32, i32
  }
}

module attributes {stable_mosaic.version = 11 : i64} {
  func.func @_gemm_shift_act_kernel(%arg0: i32, %arg1: i32, %arg2: i32, %arg3: memref<32x64xbf16, #tpu.memory_space<vmem>>, %arg4: memref<64x32xbf16, #tpu.memory_space<vmem>>, %arg5: memref<32x1xf32, #tpu.memory_space<vmem>>, %arg6: memref<32x32xbf16, #tpu.memory_space<vmem>>, %arg7: memref<32x32xf32, #tpu.memory_space<vmem>>) attributes {dimension_semantics = [#tpu.dimension_semantics<parallel>, #tpu.dimension_semantics<parallel>, #tpu.dimension_semantics<arbitrary>], iteration_bounds = array<i64: 1, 1, 1>, scalar_prefetch = 0 : i64, scratch_operands = 1 : i64, tpu.core_type = #tpu.core_type<tc>, window_params = [{transform_indices = @transform_0, window_bounds = array<i64: 32, 64>}, {transform_indices = @transform_1, window_bounds = array<i64: 64, 32>}, {transform_indices = @transform_2, window_bounds = array<i64: 32, 1>}, {transform_indices = @transform_3, window_bounds = array<i64: 32, 32>}]} {
    %c0_i32 = arith.constant 0 : i32
    %0 = arith.cmpi eq, %arg2, %c0_i32 : i32
    %1 = arith.extui %0 : i1 to i32
    %c0_i32_0 = arith.constant 0 : i32
    %2 = arith.cmpi ne, %1, %c0_i32_0 : i32
    scf.if %2 {
      %cst_10 = arith.constant 0.000000e+00 : f32
      %12 = vector.broadcast %cst_10 : f32 to vector<32x32xf32>
      %c0_11 = arith.constant 0 : index
      %c0_12 = arith.constant 0 : index
      %13 = vector.load %arg7[%c0_11, %c0_12] : memref<32x32xf32, #tpu.memory_space<vmem>>, vector<32x32xf32>
      tpu.vector_store %arg7[%c0_11, %c0_12], %12 {strides = array<i32>} : memref<32x32xf32, #tpu.memory_space<vmem>>, vector<32x32xf32>,
    } else {
    }
    %c0 = arith.constant 0 : index
    %c0_1 = arith.constant 0 : index
    %3 = vector.load %arg7[%c0, %c0_1] : memref<32x32xf32, #tpu.memory_space<vmem>>, vector<32x32xf32>
    %c0_2 = arith.constant 0 : index
    %c0_3 = arith.constant 0 : index
    %4 = vector.load %arg3[%c0_2, %c0_3] : memref<32x64xbf16, #tpu.memory_space<vmem>>, vector<32x64xbf16>
    %c0_4 = arith.constant 0 : index
    %c0_5 = arith.constant 0 : index
    %5 = vector.load %arg4[%c0_4, %c0_5] : memref<64x32xbf16, #tpu.memory_space<vmem>>, vector<64x32xbf16>
    %cst = arith.constant dense<0.000000e+00> : vector<32x32xf32>
    %6 = tpu.matmul %4, %5, %cst {dimension_numbers = #tpu.dot_dimension_numbers<[1], [0], [0], [1], [0, 0, 1, 1], [], []>} : vector<32x64xbf16>, vector<64x32xbf16>, vector<32x32xf32> -> vector<32x32xf32>
    %7 = arith.addf %3, %6 : vector<32x32xf32>
    %c0_6 = arith.constant 0 : index
    %c0_7 = arith.constant 0 : index
    %8 = vector.load %arg7[%c0_6, %c0_7] : memref<32x32xf32, #tpu.memory_space<vmem>>, vector<32x32xf32>
    tpu.vector_store %arg7[%c0_6, %c0_7], %7 {strides = array<i32>} : memref<32x32xf32, #tpu.memory_space<vmem>>, vector<32x32xf32>,
    %c0_i32_8 = arith.constant 0 : i32
    %9 = arith.cmpi eq, %arg2, %c0_i32_8 : i32
    %10 = arith.extui %9 : i1 to i32
    %c0_i32_9 = arith.constant 0 : i32
    %11 = arith.cmpi ne, %10, %c0_i32_9 : i32
    scf.if %11 {
      %c0_10 = arith.constant 0 : index
      %c0_11 = arith.constant 0 : index
      %12 = vector.load %arg7[%c0_10, %c0_11] : memref<32x32xf32, #tpu.memory_space<vmem>>, vector<32x32xf32>
      %c0_12 = arith.constant 0 : index
      %c0_13 = arith.constant 0 : index
      %13 = vector.load %arg5[%c0_12, %c0_13] : memref<32x1xf32, #tpu.memory_space<vmem>>, vector<32x1xf32>
      %14 = vector.broadcast %13 : vector<32x1xf32> to vector<32x32xf32>
      %15 = arith.addf %12, %14 : vector<32x32xf32>
      %cst_14 = arith.constant 0.000000e+00 : f32
      %16 = vector.broadcast %cst_14 : f32 to vector<32x32xf32>
      %17 = arith.maximumf %15, %16 : vector<32x32xf32>
      %18 = arith.truncf %17 : vector<32x32xf32> to vector<32x32xbf16>
      %c0_15 = arith.constant 0 : index
      %c0_16 = arith.constant 0 : index
      %19 = vector.load %arg6[%c0_15, %c0_16] : memref<32x32xbf16, #tpu.memory_space<vmem>>, vector<32x32xbf16>
      tpu.vector_store %arg6[%c0_15, %c0_16], %18 {strides = array<i32>} : memref<32x32xbf16, #tpu.memory_space<vmem>>, vector<32x32xbf16>,
    } else {
    }
    return
  }
  func.func @transform_0(%arg0: i32, %arg1: i32, %arg2: i32) -> (i32, i32) {
    %c0_i32 = arith.constant 0 : i32
    return %arg0, %arg2 : i32, i32
  }
  func.func @transform_1(%arg0: i32, %arg1: i32, %arg2: i32) -> (i32, i32) {
    %c0_i32 = arith.constant 0 : i32
    return %arg2, %arg1 : i32, i32
  }
  func.func @transform_2(%arg0: i32, %arg1: i32, %arg2: i32) -> (i32, i32) {
    %c0_i32 = arith.constant 0 : i32
    %c0_i32_0 = arith.constant 0 : i32
    return %arg0, %c0_i32 : i32, i32
  }
  func.func @transform_3(%arg0: i32, %arg1: i32, %arg2: i32) -> (i32, i32) {
    %c0_i32 = arith.constant 0 : i32
    return %arg0, %arg1 : i32, i32
  }
}

module attributes {stable_mosaic.version = 11 : i64} {
  func.func @_gemm_shift_act_kernel(%arg0: i32, %arg1: i32, %arg2: i32, %arg3: memref<16x32xbf16, #tpu.memory_space<vmem>>, %arg4: memref<32x128xbf16, #tpu.memory_space<vmem>>, %arg5: memref<16x1xf32, #tpu.memory_space<vmem>>, %arg6: memref<16x128xf32, #tpu.memory_space<vmem>>, %arg7: memref<16x128xf32, #tpu.memory_space<vmem>>) attributes {dimension_semantics = [#tpu.dimension_semantics<parallel>, #tpu.dimension_semantics<parallel>, #tpu.dimension_semantics<arbitrary>], iteration_bounds = array<i64: 1, 1, 1>, scalar_prefetch = 0 : i64, scratch_operands = 1 : i64, tpu.core_type = #tpu.core_type<tc>, window_params = [{transform_indices = @transform_0, window_bounds = array<i64: 16, 32>}, {transform_indices = @transform_1, window_bounds = array<i64: 32, 128>}, {transform_indices = @transform_2, window_bounds = array<i64: 16, 1>}, {transform_indices = @transform_3, window_bounds = array<i64: 16, 128>}]} {
    %c0_i32 = arith.constant 0 : i32
    %0 = arith.cmpi eq, %arg2, %c0_i32 : i32
    %1 = arith.extui %0 : i1 to i32
    %c0_i32_0 = arith.constant 0 : i32
    %2 = arith.cmpi ne, %1, %c0_i32_0 : i32
    scf.if %2 {
      %cst_10 = arith.constant 0.000000e+00 : f32
      %12 = vector.broadcast %cst_10 : f32 to vector<16x128xf32>
      %c0_11 = arith.constant 0 : index
      %c0_12 = arith.constant 0 : index
      %13 = vector.load %arg7[%c0_11, %c0_12] : memref<16x128xf32, #tpu.memory_space<vmem>>, vector<16x128xf32>
      tpu.vector_store %arg7[%c0_11, %c0_12], %12 {strides = array<i32>} : memref<16x128xf32, #tpu.memory_space<vmem>>, vector<16x128xf32>,
    } else {
    }
    %c0 = arith.constant 0 : index
    %c0_1 = arith.constant 0 : index
    %3 = vector.load %arg7[%c0, %c0_1] : memref<16x128xf32, #tpu.memory_space<vmem>>, vector<16x128xf32>
    %c0_2 = arith.constant 0 : index
    %c0_3 = arith.constant 0 : index
    %4 = vector.load %arg3[%c0_2, %c0_3] : memref<16x32xbf16, #tpu.memory_space<vmem>>, vector<16x32xbf16>
    %c0_4 = arith.constant 0 : index
    %c0_5 = arith.constant 0 : index
    %5 = vector.load %arg4[%c0_4, %c0_5] : memref<32x128xbf16, #tpu.memory_space<vmem>>, vector<32x128xbf16>
    %cst = arith.constant dense<0.000000e+00> : vector<16x128xf32>
    %6 = tpu.matmul %4, %5, %cst {dimension_numbers = #tpu.dot_dimension_numbers<[1], [0], [0], [1], [0, 0, 1, 1], [], []>} : vector<16x32xbf16>, vector<32x128xbf16>, vector<16x128xf32> -> vector<16x128xf32>
    %7 = arith.addf %3, %6 : vector<16x128xf32>
    %c0_6 = arith.constant 0 : index
    %c0_7 = arith.constant 0 : index
    %8 = vector.load %arg7[%c0_6, %c0_7] : memref<16x128xf32, #tpu.memory_space<vmem>>, vector<16x128xf32>
    tpu.vector_store %arg7[%c0_6, %c0_7], %7 {strides = array<i32>} : memref<16x128xf32, #tpu.memory_space<vmem>>, vector<16x128xf32>,
    %c0_i32_8 = arith.constant 0 : i32
    %9 = arith.cmpi eq, %arg2, %c0_i32_8 : i32
    %10 = arith.extui %9 : i1 to i32
    %c0_i32_9 = arith.constant 0 : i32
    %11 = arith.cmpi ne, %10, %c0_i32_9 : i32
    scf.if %11 {
      %c0_10 = arith.constant 0 : index
      %c0_11 = arith.constant 0 : index
      %12 = vector.load %arg7[%c0_10, %c0_11] : memref<16x128xf32, #tpu.memory_space<vmem>>, vector<16x128xf32>
      %c0_12 = arith.constant 0 : index
      %c0_13 = arith.constant 0 : index
      %13 = vector.load %arg5[%c0_12, %c0_13] : memref<16x1xf32, #tpu.memory_space<vmem>>, vector<16x1xf32>
      %14 = vector.broadcast %13 : vector<16x1xf32> to vector<16x128xf32>
      %15 = arith.addf %12, %14 : vector<16x128xf32>
      %c0_14 = arith.constant 0 : index
      %c0_15 = arith.constant 0 : index
      %16 = vector.load %arg6[%c0_14, %c0_15] : memref<16x128xf32, #tpu.memory_space<vmem>>, vector<16x128xf32>
      tpu.vector_store %arg6[%c0_14, %c0_15], %15 {strides = array<i32>} : memref<16x128xf32, #tpu.memory_space<vmem>>, vector<16x128xf32>,
    } else {
    }
    return
  }
  func.func @transform_0(%arg0: i32, %arg1: i32, %arg2: i32) -> (i32, i32) {
    %c0_i32 = arith.constant 0 : i32
    return %arg0, %arg2 : i32, i32
  }
  func.func @transform_1(%arg0: i32, %arg1: i32, %arg2: i32) -> (i32, i32) {
    %c0_i32 = arith.constant 0 : i32
    return %arg2, %arg1 : i32, i32
  }
  func.func @transform_2(%arg0: i32, %arg1: i32, %arg2: i32) -> (i32, i32) {
    %c0_i32 = arith.constant 0 : i32
    %c0_i32_0 = arith.constant 0 : i32
    return %arg0, %c0_i32 : i32, i32
  }
  func.func @transform_3(%arg0: i32, %arg1: i32, %arg2: i32) -> (i32, i32) {
    %c0_i32 = arith.constant 0 : i32
    return %arg0, %arg1 : i32, i32
  }
}

</mosaic_0001>

<llo_original>
// kernel: autoencoder_forward.4
$region0: #{autoencoder_forward.4}
  #allocation0 [shape = 'u32[]', space=smem, size = 0x4, offset = 0x4, fixed_abs, tag = 'smem constant byte address 0x4 - core index']
  #allocation1 [shape = 'u32[72,128]{1,0:T(1,128)}', space=vmem, size = 0x9000, scoped, tag = 'internal scratch']
  #allocation2 [shape = 'f32[8,128]{1,0:T(8,128)}', space=vmem, size = 0x1000, scoped, tag = 'scratch operand']
  %s0 = inlined_call_operand.vmem [shape: bf16[8,36], index: 0, kind: input, shape index: {}]
  %s1 = inlined_call_operand.vmem [shape: bf16[36,128], index: 1, kind: input, shape index: {}]
  %s2 = inlined_call_operand.vmem [shape: f32[8,1], index: 2, kind: input, shape index: {}]
  %s3 = inlined_call_operand.vmem [shape: bf16[8,128], index: 3, kind: output, shape index: {}]
  %s4 = sld [smem:[#allocation0]]
  $region30: #{autoencoder_forward.4} parent=0
    _
  %s6 = ssub.s32 1, %s4
  %s7 = scalar_select 0, %s6, %s4
  // Predicated region
  $region2: #{autoencoder_forward.4} parent=0 // pred_check
    _
  $region3: #{autoencoder_forward.4} parent=0 // pred_check_branch
    %9 = sbr.rel (0) target = $region5
  $region4: #{autoencoder_forward.4} parent=0 // pred_region
    _
  $region5: #{autoencoder_forward.4} parent=0 // pred_fallthru
    _
  // Predicated region
  $region6: #{autoencoder_forward.4} parent=0 // pred_check
    _
  $region7: #{autoencoder_forward.4} parent=0 // pred_check_branch
    %11 = sbr.rel (0) target = $region9
  $region8: #{autoencoder_forward.4} parent=0 // pred_region
    _
  $region9: #{autoencoder_forward.4} parent=0 // pred_fallthru
    _
  // Predicated region
  $region10: #{autoencoder_forward.4} parent=0 // pred_check
    _
  $region11: #{autoencoder_forward.4} parent=0 // pred_check_branch
    %13 = sbr.rel (0) target = $region13
  $region12: #{autoencoder_forward.4} parent=0 // pred_region
    _
  $region13: #{autoencoder_forward.4} parent=0 // pred_fallthru
    _
  %p15 = scmp.eq.s32.totalorder 0, 0
  // Predicated region
  $region14: #{autoencoder_forward.4} parent=0 // pred_check
    %p16 = pneg %p15
  $region15: #{autoencoder_forward.4} parent=0 // pred_check_branch
    %18 = sbr.rel (%p16) target = $region17
  $region16: #{autoencoder_forward.4} parent=0 // pred_region
    %19 = vst [vmem:[#allocation2] sm:$0xff] 0.0
  $region17: #{autoencoder_forward.4} parent=0 // pred_fallthru
    _
  %v20 = vld [vmem:[#allocation2] sm:$0xff]
  %v21 = vld [vmem:[%s0] sm:$0xf]
  %v22 = vld [vmem:[%s1] sm:$0xf]
  %v23 = vld [vmem:[%s1 + $0x4] sm:$0xf]
  %v24 = vld [vmem:[%s1 + $0x8] sm:$0xf]
  %v25 = vld [vmem:[%s1 + $0xc] sm:$0xf]
  %v26 = vld [vmem:[%s1 + $0x10] sm:$0x3]
  %v32 = vunpack.c.l.b16 %v22
  %v33 = vunpack.c.l.b16 %v23
  %v34 = vunpack.c.l.b16 %v24
  %v35 = vunpack.c.l.b16 %v25
  %v36 = vunpack.c.l.b16 %v26
  %v37 = vpack.c.b16 %v33, %v32
  %v38 = vpack.c.b16 %v35, %v34
  %v39 = vpack.c.b16 %v36, %v36
  %vm42 = vcmask 293888
  %v44 = vsel %vm42, %v21, 0
  %vm46 = vcmask 1041408
  %v48 = vsel %vm46, %v39, 0
  %50 = vmatpush.bf16.msra.mxu0 0
  %51 = vmatpush.bf16.msra.mxu0 0
  %52 = vmatpush.bf16.msra.mxu0 0
  %53 = vmatpush.bf16.msra.mxu0 0
  %54 = vmatpush.bf16.msra.mxu0 0
  %55 = vmatpush.bf16.msra.mxu0 %v48
  %56 = vmatpush.bf16.msra.mxu0 %v38
  %57 = vmatpush.bf16.msra.mxu0 %v37
  %58 = vmatmul.bf16.gmra.mxu0 %v44
  %v59 = vpop.f32.mrf.mxu0
  %v60 = vadd.f32 0.0, %v59
  %v61 = vpop.f32.mrf.mxu0
  %62 = vdwg.mxu0
  %v63 = vadd.f32 %v20, %v60
  %64 = vst [vmem:[#allocation2] sm:$0xff] %v63
  // Predicated region
  $region18: #{autoencoder_forward.4} parent=0 // pred_check
    %p65 = pneg %p15
  $region19: #{autoencoder_forward.4} parent=0 // pred_check_branch
    %67 = sbr.rel (%p65) target = $region21
  $region20: #{autoencoder_forward.4} parent=0 // pred_region
    %v68 = vld [vmem:[#allocation2] sm:$0xff]
    %v69 = vld [vmem:[%s2] sm:$0xff]
    %71 = vset.pattern.permute.xlu0 0
    %72 = vperm.xlu0 %71, %v69
    %v73 = vpop.permute.xlu0 %72
    %v75 = vadd.f32 %v68, %v73
    %v76 = vmax.f32 %v75, 0.0
    %v77 = vpack.c.bf16 %v76, %v76
    %78 = vst [vmem:[%s3] sm:$0xf] %v77
  $region21: #{autoencoder_forward.4} parent=0 // pred_fallthru
    _
  // Predicated region
  $region22: #{autoencoder_forward.4} parent=0 // pred_check
    _
  $region23: #{autoencoder_forward.4} parent=0 // pred_check_branch
    %80 = sbr.rel (0) target = $region25
  $region24: #{autoencoder_forward.4} parent=0 // pred_region
    _
  $region25: #{autoencoder_forward.4} parent=0 // pred_fallthru
    _
  // Predicated region
  $region26: #{autoencoder_forward.4} parent=0 // pred_check
    _
  $region27: #{autoencoder_forward.4} parent=0 // pred_check_branch
    %82 = sbr.rel (0) target = $region29
  $region28: #{autoencoder_forward.4} parent=0 // pred_region
    _
  $region29: #{autoencoder_forward.4} parent=0 // pred_fallthru
    _

// kernel: autoencoder_forward.5
$region0: #{autoencoder_forward.5}
  #allocation0 [shape = 'u32[]', space=smem, size = 0x4, offset = 0x4, fixed_abs, tag = 'smem constant byte address 0x4 - core index']
  #allocation1 [shape = 'u32[72,128]{1,0:T(1,128)}', space=vmem, size = 0x9000, scoped, tag = 'internal scratch']
  #allocation2 [shape = 'f32[16,32]{1,0:T(8,128)}', space=vmem, size = 0x2000, scoped, tag = 'scratch operand']
  %s0 = inlined_call_operand.vmem [shape: bf16[16,72], index: 0, kind: input, shape index: {}]
  %s1 = inlined_call_operand.vmem [shape: bf16[72,32], index: 1, kind: input, shape index: {}]
  %s2 = inlined_call_operand.vmem [shape: f32[16,1], index: 2, kind: input, shape index: {}]
  %s3 = inlined_call_operand.vmem [shape: bf16[16,32], index: 3, kind: output, shape index: {}]
  %s4 = sld [smem:[#allocation0]]
  $region30: #{autoencoder_forward.5} parent=0
    _
  %s6 = ssub.s32 1, %s4
  %s7 = scalar_select 0, %s6, %s4
  // Predicated region
  $region2: #{autoencoder_forward.5} parent=0 // pred_check
    _
  $region3: #{autoencoder_forward.5} parent=0 // pred_check_branch
    %9 = sbr.rel (0) target = $region5
  $region4: #{autoencoder_forward.5} parent=0 // pred_region
    _
  $region5: #{autoencoder_forward.5} parent=0 // pred_fallthru
    _
  // Predicated region
  $region6: #{autoencoder_forward.5} parent=0 // pred_check
    _
  $region7: #{autoencoder_forward.5} parent=0 // pred_check_branch
    %11 = sbr.rel (0) target = $region9
  $region8: #{autoencoder_forward.5} parent=0 // pred_region
    _
  $region9: #{autoencoder_forward.5} parent=0 // pred_fallthru
    _
  // Predicated region
  $region10: #{autoencoder_forward.5} parent=0 // pred_check
    _
  $region11: #{autoencoder_forward.5} parent=0 // pred_check_branch
    %13 = sbr.rel (0) target = $region13
  $region12: #{autoencoder_forward.5} parent=0 // pred_region
    _
  $region13: #{autoencoder_forward.5} parent=0 // pred_fallthru
    _
  %p15 = scmp.eq.s32.totalorder 0, 0
  // Predicated region
  $region14: #{autoencoder_forward.5} parent=0 // pred_check
    %p16 = pneg %p15
  $region15: #{autoencoder_forward.5} parent=0 // pred_check_branch
    %18 = sbr.rel (%p16) target = $region17
  $region16: #{autoencoder_forward.5} parent=0 // pred_region
    %vm19 = vcmask 261120
    %20 = vst.msk [vmem:[#allocation2] sm:$0xff] %vm19, 0.0
    %21 = vst.msk [vmem:[#allocation2 + $0x8] sm:$0xff] %vm19, 0.0
  $region17: #{autoencoder_forward.5} parent=0 // pred_fallthru
    _
  %v22 = vld [vmem:[#allocation2] sm:$0xff]
  %v23 = vld [vmem:[#allocation2 + $0x8] sm:$0xff]
  %v24 = vld [vmem:[%s0] sm:$0xf]
  %v25 = vld [vmem:[%s0 + $0x4] sm:$0xf]
  %v26 = vld [vmem:[%s1] sm:$0xf]
  %v27 = vld [vmem:[%s1 + $0x4] sm:$0xf]
  %v28 = vld [vmem:[%s1 + $0x8] sm:$0xf]
  %v29 = vld [vmem:[%s1 + $0xc] sm:$0xf]
  %v30 = vld [vmem:[%s1 + $0x10] sm:$0xf]
  %v31 = vld [vmem:[%s1 + $0x14] sm:$0xf]
  %v32 = vld [vmem:[%s1 + $0x18] sm:$0xf]
  %v33 = vld [vmem:[%s1 + $0x1c] sm:$0xf]
  %v34 = vld [vmem:[%s1 + $0x20] sm:$0xf]
  %v37 = vunpack.c.l.b16 %v24
  %v38 = vunpack.c.l.b16 %v25
  %v39 = vpack.c.b16 %v38, %v37
  %v49 = vunpack.c.l.b16 %v26
  %v50 = vunpack.c.l.b16 %v27
  %v51 = vunpack.c.l.b16 %v28
  %v52 = vunpack.c.l.b16 %v29
  %v53 = vunpack.c.l.b16 %v30
  %v54 = vunpack.c.l.b16 %v31
  %v55 = vunpack.c.l.b16 %v32
  %v56 = vunpack.c.l.b16 %v33
  %v57 = vunpack.c.l.b16 %v34
  %v58 = vpack.c.b16 %v50, %v49
  %v59 = vpack.c.b16 %v52, %v51
  %v60 = vpack.c.b16 %v54, %v53
  %v61 = vpack.c.b16 %v56, %v55
  %v62 = vpack.c.b16 %v57, %v57
  %vm67 = vcmask 588800
  %v69 = vsel %vm67, %v39, 0
  %vm71 = vcmask 1043456
  %v73 = vsel %vm71, %v62, 0
  %75 = vmatpush.bf16.msra.mxu0 0
  %76 = vmatpush.bf16.msra.mxu0 0
  %77 = vmatpush.bf16.msra.mxu0 0
  %78 = vmatpush.bf16.msra.mxu0 %v73
  %79 = vmatpush.bf16.msra.mxu0 %v61
  %80 = vmatpush.bf16.msra.mxu0 %v60
  %81 = vmatpush.bf16.msra.mxu0 %v59
  %82 = vmatpush.bf16.msra.mxu0 %v58
  %83 = vmatmul.bf16.gmra.mxu0 %v69
  %v84 = vpop.f32.mrf.mxu0
  %v85 = vadd.f32 0.0, %v84
  %v86 = vpop.f32.mrf.mxu0
  %v87 = vadd.f32 0.0, %v86
  %88 = vdwg.mxu0
  %v89 = vadd.f32 %v22, %v85
  %v90 = vadd.f32 %v23, %v87
  %vm91 = vcmask 261120
  %92 = vst.msk [vmem:[#allocation2] sm:$0xff] %vm91, %v89
  %93 = vst.msk [vmem:[#allocation2 + $0x8] sm:$0xff] %vm91, %v90
  // Predicated region
  $region18: #{autoencoder_forward.5} parent=0 // pred_check
    %p94 = pneg %p15
  $region19: #{autoencoder_forward.5} parent=0 // pred_check_branch
    %96 = sbr.rel (%p94) target = $region21
  $region20: #{autoencoder_forward.5} parent=0 // pred_region
    %v97 = vld [vmem:[#allocation2] sm:$0xff]
    %v98 = vld [vmem:[#allocation2 + $0x8] sm:$0xff]
    %v99 = vld [vmem:[%s2] sm:$0xff]
    %v100 = vld [vmem:[%s2 + $0x8] sm:$0xff]
    %102 = vset.pattern.permute.xlu0 0
    %103 = vperm.xlu0 %102, %v99
    %v104 = vpop.permute.xlu0 %103
    %107 = vset.pattern.permute.xlu0 0
    %108 = vperm.xlu0 %107, %v100
    %v109 = vpop.permute.xlu0 %108
    %v111 = vadd.f32 %v97, %v104
    %v112 = vadd.f32 %v98, %v109
    %v113 = vmax.f32 %v111, 0.0
    %v114 = vmax.f32 %v112, 0.0
    %v115 = vpack.c.bf16 %v113, %v113
    %v116 = vpack.c.bf16 %v114, %v114
    %vm117 = vcmask 257024
    %118 = vst.msk [vmem:[%s3] sm:$0xf] %vm117, %v115
    %119 = vst.msk [vmem:[%s3 + $0x4] sm:$0xf] %vm117, %v116
  $region21: #{autoencoder_forward.5} parent=0 // pred_fallthru
    _
  // Predicated region
  $region22: #{autoencoder_forward.5} parent=0 // pred_check
    _
  $region23: #{autoencoder_forward.5} parent=0 // pred_check_branch
    %121 = sbr.rel (0) target = $region25
  $region24: #{autoencoder_forward.5} parent=0 // pred_region
    _
  $region25: #{autoencoder_forward.5} parent=0 // pred_fallthru
    _
  // Predicated region
  $region26: #{autoencoder_forward.5} parent=0 // pred_check
    _
  $region27: #{autoencoder_forward.5} parent=0 // pred_check_branch
    %123 = sbr.rel (0) target = $region29
  $region28: #{autoencoder_forward.5} parent=0 // pred_region
    _
  $region29: #{autoencoder_forward.5} parent=0 // pred_fallthru
    _

// kernel: autoencoder_forward.6
$region0: #{autoencoder_forward.6}
  #allocation0 [shape = 'u32[]', space=smem, size = 0x4, offset = 0x4, fixed_abs, tag = 'smem constant byte address 0x4 - core index']
  #allocation1 [shape = 'u32[72,128]{1,0:T(1,128)}', space=vmem, size = 0x9000, scoped, tag = 'internal scratch']
  #allocation2 [shape = 'f32[32,32]{1,0:T(8,128)}', space=vmem, size = 0x4000, scoped, tag = 'scratch operand']
  %s0 = inlined_call_operand.vmem [shape: bf16[32,64], index: 0, kind: input, shape index: {}]
  %s1 = inlined_call_operand.vmem [shape: bf16[64,32], index: 1, kind: input, shape index: {}]
  %s2 = inlined_call_operand.vmem [shape: f32[32,1], index: 2, kind: input, shape index: {}]
  %s3 = inlined_call_operand.vmem [shape: bf16[32,32], index: 3, kind: output, shape index: {}]
  %s4 = sld [smem:[#allocation0]]
  $region30: #{autoencoder_forward.6} parent=0
    _
  %s6 = ssub.s32 1, %s4
  %s7 = scalar_select 0, %s6, %s4
  // Predicated region
  $region2: #{autoencoder_forward.6} parent=0 // pred_check
    _
  $region3: #{autoencoder_forward.6} parent=0 // pred_check_branch
    %9 = sbr.rel (0) target = $region5
  $region4: #{autoencoder_forward.6} parent=0 // pred_region
    _
  $region5: #{autoencoder_forward.6} parent=0 // pred_fallthru
    _
  // Predicated region
  $region6: #{autoencoder_forward.6} parent=0 // pred_check
    _
  $region7: #{autoencoder_forward.6} parent=0 // pred_check_branch
    %11 = sbr.rel (0) target = $region9
  $region8: #{autoencoder_forward.6} parent=0 // pred_region
    _
  $region9: #{autoencoder_forward.6} parent=0 // pred_fallthru
    _
  // Predicated region
  $region10: #{autoencoder_forward.6} parent=0 // pred_check
    _
  $region11: #{autoencoder_forward.6} parent=0 // pred_check_branch
    %13 = sbr.rel (0) target = $region13
  $region12: #{autoencoder_forward.6} parent=0 // pred_region
    _
  $region13: #{autoencoder_forward.6} parent=0 // pred_fallthru
    _
  %p15 = scmp.eq.s32.totalorder 0, 0
  // Predicated region
  $region14: #{autoencoder_forward.6} parent=0 // pred_check
    %p16 = pneg %p15
  $region15: #{autoencoder_forward.6} parent=0 // pred_check_branch
    %18 = sbr.rel (%p16) target = $region17
  $region16: #{autoencoder_forward.6} parent=0 // pred_region
    %vm19 = vcmask 261120
    %20 = vst.msk [vmem:[#allocation2] sm:$0xff] %vm19, 0.0
    %21 = vst.msk [vmem:[#allocation2 + $0x8] sm:$0xff] %vm19, 0.0
    %22 = vst.msk [vmem:[#allocation2 + $0x10] sm:$0xff] %vm19, 0.0
    %23 = vst.msk [vmem:[#allocation2 + $0x18] sm:$0xff] %vm19, 0.0
  $region17: #{autoencoder_forward.6} parent=0 // pred_fallthru
    _
  %v24 = vld [vmem:[#allocation2] sm:$0xff]
  %v25 = vld [vmem:[#allocation2 + $0x8] sm:$0xff]
  %v26 = vld [vmem:[#allocation2 + $0x10] sm:$0xff]
  %v27 = vld [vmem:[#allocation2 + $0x18] sm:$0xff]
  %v28 = vld [vmem:[%s0] sm:$0xf]
  %v29 = vld [vmem:[%s0 + $0x4] sm:$0xf]
  %v30 = vld [vmem:[%s0 + $0x8] sm:$0xf]
  %v31 = vld [vmem:[%s0 + $0xc] sm:$0xf]
  %v32 = vld [vmem:[%s1] sm:$0xf]
  %v33 = vld [vmem:[%s1 + $0x4] sm:$0xf]
  %v34 = vld [vmem:[%s1 + $0x8] sm:$0xf]
  %v35 = vld [vmem:[%s1 + $0xc] sm:$0xf]
  %v36 = vld [vmem:[%s1 + $0x10] sm:$0xf]
  %v37 = vld [vmem:[%s1 + $0x14] sm:$0xf]
  %v38 = vld [vmem:[%s1 + $0x18] sm:$0xf]
  %v39 = vld [vmem:[%s1 + $0x1c] sm:$0xf]
  %v44 = vunpack.c.l.b16 %v28
  %v45 = vunpack.c.l.b16 %v29
  %v46 = vunpack.c.l.b16 %v30
  %v47 = vunpack.c.l.b16 %v31
  %v48 = vpack.c.b16 %v45, %v44
  %v49 = vpack.c.b16 %v47, %v46
  %v58 = vunpack.c.l.b16 %v32
  %v59 = vunpack.c.l.b16 %v33
  %v60 = vunpack.c.l.b16 %v34
  %v61 = vunpack.c.l.b16 %v35
  %v62 = vunpack.c.l.b16 %v36
  %v63 = vunpack.c.l.b16 %v37
  %v64 = vunpack.c.l.b16 %v38
  %v65 = vunpack.c.l.b16 %v39
  %v66 = vpack.c.b16 %v59, %v58
  %v67 = vpack.c.b16 %v61, %v60
  %v68 = vpack.c.b16 %v63, %v62
  %v69 = vpack.c.b16 %v65, %v64
  %vm74 = vcmask 523264
  %v76 = vsel %vm74, %v48, 0
  %v79 = vsel %vm74, %v49, 0
  %81 = vmatpush.bf16.msra.mxu0 0
  %82 = vmatpush.bf16.msra.mxu0 0
  %83 = vmatpush.bf16.msra.mxu0 0
  %84 = vmatpush.bf16.msra.mxu0 0
  %85 = vmatpush.bf16.msra.mxu0 %v69
  %86 = vmatpush.bf16.msra.mxu0 %v68
  %87 = vmatpush.bf16.msra.mxu0 %v67
  %88 = vmatpush.bf16.msra.mxu0 %v66
  %89 = vmatmul.bf16.gmra.mxu0 %v76
  %v90 = vpop.f32.mrf.mxu0
  %v91 = vadd.f32 0.0, %v90
  %v92 = vpop.f32.mrf.mxu0
  %v93 = vadd.f32 0.0, %v92
  %94 = vmatmul.bf16.gmra.mxu0 %v79
  %v95 = vpop.f32.mrf.mxu0
  %v96 = vadd.f32 0.0, %v95
  %v97 = vpop.f32.mrf.mxu0
  %v98 = vadd.f32 0.0, %v97
  %99 = vdwg.mxu0
  %v100 = vadd.f32 %v24, %v91
  %v101 = vadd.f32 %v25, %v93
  %v102 = vadd.f32 %v26, %v96
  %v103 = vadd.f32 %v27, %v98
  %vm104 = vcmask 261120
  %105 = vst.msk [vmem:[#allocation2] sm:$0xff] %vm104, %v100
  %106 = vst.msk [vmem:[#allocation2 + $0x8] sm:$0xff] %vm104, %v101
  %107 = vst.msk [vmem:[#allocation2 + $0x10] sm:$0xff] %vm104, %v102
  %108 = vst.msk [vmem:[#allocation2 + $0x18] sm:$0xff] %vm104, %v103
  // Predicated region
  $region18: #{autoencoder_forward.6} parent=0 // pred_check
    %p109 = pneg %p15
  $region19: #{autoencoder_forward.6} parent=0 // pred_check_branch
    %111 = sbr.rel (%p109) target = $region21
  $region20: #{autoencoder_forward.6} parent=0 // pred_region
    %v112 = vld [vmem:[#allocation2] sm:$0xff]
    %v113 = vld [vmem:[#allocation2 + $0x8] sm:$0xff]
    %v114 = vld [vmem:[#allocation2 + $0x10] sm:$0xff]
    %v115 = vld [vmem:[#allocation2 + $0x18] sm:$0xff]
    %v116 = vld [vmem:[%s2] sm:$0xff]
    %v117 = vld [vmem:[%s2 + $0x8] sm:$0xff]
    %v118 = vld [vmem:[%s2 + $0x10] sm:$0xff]
    %v119 = vld [vmem:[%s2 + $0x18] sm:$0xff]
    %121 = vset.pattern.permute.xlu0 0
    %122 = vperm.xlu0 %121, %v116
    %v123 = vpop.permute.xlu0 %122
    %126 = vset.pattern.permute.xlu0 0
    %127 = vperm.xlu0 %126, %v117
    %v128 = vpop.permute.xlu0 %127
    %131 = vset.pattern.permute.xlu0 0
    %132 = vperm.xlu0 %131, %v118
    %v133 = vpop.permute.xlu0 %132
    %136 = vset.pattern.permute.xlu0 0
    %137 = vperm.xlu0 %136, %v119
    %v138 = vpop.permute.xlu0 %137
    %v140 = vadd.f32 %v112, %v123
    %v141 = vadd.f32 %v113, %v128
    %v142 = vadd.f32 %v114, %v133
    %v143 = vadd.f32 %v115, %v138
    %v144 = vmax.f32 %v140, 0.0
    %v145 = vmax.f32 %v141, 0.0
    %v146 = vmax.f32 %v142, 0.0
    %v147 = vmax.f32 %v143, 0.0
    %v148 = vpack.c.bf16 %v144, %v144
    %v149 = vpack.c.bf16 %v145, %v145
    %v150 = vpack.c.bf16 %v146, %v146
    %v151 = vpack.c.bf16 %v147, %v147
    %vm152 = vcmask 257024
    %153 = vst.msk [vmem:[%s3] sm:$0xf] %vm152, %v148
    %154 = vst.msk [vmem:[%s3 + $0x4] sm:$0xf] %vm152, %v149
    %155 = vst.msk [vmem:[%s3 + $0x8] sm:$0xf] %vm152, %v150
    %156 = vst.msk [vmem:[%s3 + $0xc] sm:$0xf] %vm152, %v151
  $region21: #{autoencoder_forward.6} parent=0 // pred_fallthru
    _
  // Predicated region
  $region22: #{autoencoder_forward.6} parent=0 // pred_check
    _
  $region23: #{autoencoder_forward.6} parent=0 // pred_check_branch
    %158 = sbr.rel (0) target = $region25
  $region24: #{autoencoder_forward.6} parent=0 // pred_region
    _
  $region25: #{autoencoder_forward.6} parent=0 // pred_fallthru
    _
  // Predicated region
  $region26: #{autoencoder_forward.6} parent=0 // pred_check
    _
  $region27: #{autoencoder_forward.6} parent=0 // pred_check_branch
    %160 = sbr.rel (0) target = $region29
  $region28: #{autoencoder_forward.6} parent=0 // pred_region
    _
  $region29: #{autoencoder_forward.6} parent=0 // pred_fallthru
    _

// kernel: autoencoder_forward.7
$region0: #{autoencoder_forward.7}
  #allocation0 [shape = 'u32[]', space=smem, size = 0x4, offset = 0x4, fixed_abs, tag = 'smem constant byte address 0x4 - core index']
  #allocation1 [shape = 'u32[72,128]{1,0:T(1,128)}', space=vmem, size = 0x9000, scoped, tag = 'internal scratch']
  #allocation2 [shape = 'f32[16,128]{1,0:T(8,128)}', space=vmem, size = 0x2000, scoped, tag = 'scratch operand']
  %s0 = inlined_call_operand.vmem [shape: bf16[16,32], index: 0, kind: input, shape index: {}]
  %s1 = inlined_call_operand.vmem [shape: bf16[32,128], index: 1, kind: input, shape index: {}]
  %s2 = inlined_call_operand.vmem [shape: f32[16,1], index: 2, kind: input, shape index: {}]
  %s3 = inlined_call_operand.vmem [shape: f32[16,128], index: 3, kind: output, shape index: {}]
  %s4 = sld [smem:[#allocation0]]
  $region30: #{autoencoder_forward.7} parent=0
    _
  %s6 = ssub.s32 1, %s4
  %s7 = scalar_select 0, %s6, %s4
  // Predicated region
  $region2: #{autoencoder_forward.7} parent=0 // pred_check
    _
  $region3: #{autoencoder_forward.7} parent=0 // pred_check_branch
    %9 = sbr.rel (0) target = $region5
  $region4: #{autoencoder_forward.7} parent=0 // pred_region
    _
  $region5: #{autoencoder_forward.7} parent=0 // pred_fallthru
    _
  // Predicated region
  $region6: #{autoencoder_forward.7} parent=0 // pred_check
    _
  $region7: #{autoencoder_forward.7} parent=0 // pred_check_branch
    %11 = sbr.rel (0) target = $region9
  $region8: #{autoencoder_forward.7} parent=0 // pred_region
    _
  $region9: #{autoencoder_forward.7} parent=0 // pred_fallthru
    _
  // Predicated region
  $region10: #{autoencoder_forward.7} parent=0 // pred_check
    _
  $region11: #{autoencoder_forward.7} parent=0 // pred_check_branch
    %13 = sbr.rel (0) target = $region13
  $region12: #{autoencoder_forward.7} parent=0 // pred_region
    _
  $region13: #{autoencoder_forward.7} parent=0 // pred_fallthru
    _
  %p15 = scmp.eq.s32.totalorder 0, 0
  // Predicated region
  $region14: #{autoencoder_forward.7} parent=0 // pred_check
    %p16 = pneg %p15
  $region15: #{autoencoder_forward.7} parent=0 // pred_check_branch
    %18 = sbr.rel (%p16) target = $region17
  $region16: #{autoencoder_forward.7} parent=0 // pred_region
    %19 = vst [vmem:[#allocation2] sm:$0xff] 0.0
    %20 = vst [vmem:[#allocation2 + $0x8] sm:$0xff] 0.0
  $region17: #{autoencoder_forward.7} parent=0 // pred_fallthru
    _
  %v21 = vld [vmem:[#allocation2] sm:$0xff]
  %v22 = vld [vmem:[#allocation2 + $0x8] sm:$0xff]
  %v23 = vld [vmem:[%s0] sm:$0xf]
  %v24 = vld [vmem:[%s0 + $0x4] sm:$0xf]
  %v25 = vld [vmem:[%s1] sm:$0xf]
  %v26 = vld [vmem:[%s1 + $0x4] sm:$0xf]
  %v27 = vld [vmem:[%s1 + $0x8] sm:$0xf]
  %v28 = vld [vmem:[%s1 + $0xc] sm:$0xf]
  %v31 = vunpack.c.l.b16 %v23
  %v32 = vunpack.c.l.b16 %v24
  %v33 = vpack.c.b16 %v32, %v31
  %v38 = vunpack.c.l.b16 %v25
  %v39 = vunpack.c.l.b16 %v26
  %v40 = vunpack.c.l.b16 %v27
  %v41 = vunpack.c.l.b16 %v28
  %v42 = vpack.c.b16 %v39, %v38
  %v43 = vpack.c.b16 %v41, %v40
  %vm46 = vcmask 261120
  %v48 = vsel %vm46, %v33, 0
  %50 = vmatpush.bf16.msra.mxu0 0
  %51 = vmatpush.bf16.msra.mxu0 0
  %52 = vmatpush.bf16.msra.mxu0 0
  %53 = vmatpush.bf16.msra.mxu0 0
  %54 = vmatpush.bf16.msra.mxu0 0
  %55 = vmatpush.bf16.msra.mxu0 0
  %56 = vmatpush.bf16.msra.mxu0 %v43
  %57 = vmatpush.bf16.msra.mxu0 %v42
  %58 = vmatmul.bf16.gmra.mxu0 %v48
  %v59 = vpop.f32.mrf.mxu0
  %v60 = vadd.f32 0.0, %v59
  %v61 = vpop.f32.mrf.mxu0
  %v62 = vadd.f32 0.0, %v61
  %63 = vdwg.mxu0
  %v64 = vadd.f32 %v21, %v60
  %v65 = vadd.f32 %v22, %v62
  %66 = vst [vmem:[#allocation2] sm:$0xff] %v64
  %67 = vst [vmem:[#allocation2 + $0x8] sm:$0xff] %v65
  // Predicated region
  $region18: #{autoencoder_forward.7} parent=0 // pred_check
    %p68 = pneg %p15
  $region19: #{autoencoder_forward.7} parent=0 // pred_check_branch
    %70 = sbr.rel (%p68) target = $region21
  $region20: #{autoencoder_forward.7} parent=0 // pred_region
    %v71 = vld [vmem:[#allocation2] sm:$0xff]
    %v72 = vld [vmem:[#allocation2 + $0x8] sm:$0xff]
    %v73 = vld [vmem:[%s2] sm:$0xff]
    %v74 = vld [vmem:[%s2 + $0x8] sm:$0xff]
    %76 = vset.pattern.permute.xlu0 0
    %77 = vperm.xlu0 %76, %v73
    %v78 = vpop.permute.xlu0 %77
    %81 = vset.pattern.permute.xlu0 0
    %82 = vperm.xlu0 %81, %v74
    %v83 = vpop.permute.xlu0 %82
    %v85 = vadd.f32 %v71, %v78
    %v86 = vadd.f32 %v72, %v83
    %87 = vst [vmem:[%s3] sm:$0xff] %v85
    %88 = vst [vmem:[%s3 + $0x8] sm:$0xff] %v86
  $region21: #{autoencoder_forward.7} parent=0 // pred_fallthru
    _
  // Predicated region
  $region22: #{autoencoder_forward.7} parent=0 // pred_check
    _
  $region23: #{autoencoder_forward.7} parent=0 // pred_check_branch
    %90 = sbr.rel (0) target = $region25
  $region24: #{autoencoder_forward.7} parent=0 // pred_region
    _
  $region25: #{autoencoder_forward.7} parent=0 // pred_fallthru
    _
  // Predicated region
  $region26: #{autoencoder_forward.7} parent=0 // pred_check
    _
  $region27: #{autoencoder_forward.7} parent=0 // pred_check_branch
    %92 = sbr.rel (0) target = $region29
  $region28: #{autoencoder_forward.7} parent=0 // pred_region
    _
  $region29: #{autoencoder_forward.7} parent=0 // pred_fallthru
    _

</llo_original>
